<compile_context>
chip_gen: v7x
topology: tpu7x:2x2x1
jax: 0.10.0
libtpu: 0.0.40
codegen_flags: <defaults>
</compile_context>

<pallas_src>
import functools

import numpy as np
import jax
import jax.numpy as jnp
from jax.experimental import pallas as pl
from jax.experimental.pallas import tpu as pltpu


def make_convds_weights(scale: int) -> np.ndarray:
    """Deterministic weights matching ConvDS.setWeights()."""
    s2 = scale * scale
    w = np.eye(s2, dtype=np.float32)
    if scale == 2:
        w[0] = [0.25, 0.25, 0.25, 0.25]
        w[1] = [0.25, -0.25, 0.25, -0.25]
        w[2] = [0.25, 0.25, -0.25, -0.25]
        w[3] = [0.25, -0.25, -0.25, 0.25]
    else:
        w[0] = [1.0 / s2] * s2
    return w


def _round_up(v: int, m: int) -> int:
    return (v + m - 1) // m * m


# ----------------------------------------------------------------------------
# Kernels
# ----------------------------------------------------------------------------
def _butterfly_kernel(x_ref, o_ref):
    """scale == 2 path: Hadamard-like mix with the canonical +-0.25 weights baked in.

    x_ref / o_ref blocks have shape (1, 4, r_tile, 128); each per-phase slab is
    a fully dense (r_tile, 128) tile, so everything stays on the VPU with
    unmasked lane-dense loads/stores.
    """
    a = x_ref[0, 0, :, :].astype(jnp.float32)
    b = x_ref[0, 1, :, :].astype(jnp.float32)
    c = x_ref[0, 2, :, :].astype(jnp.float32)
    d = x_ref[0, 3, :, :].astype(jnp.float32)
    s_ab = a + b
    d_ab = a - b
    s_cd = c + d
    d_cd = c - d
    o_ref[0, 0, :, :] = (0.25 * (s_ab + s_cd)).astype(o_ref.dtype)
    o_ref[0, 1, :, :] = (0.25 * (d_ab + d_cd)).astype(o_ref.dtype)
    o_ref[0, 2, :, :] = (0.25 * (s_ab - s_cd)).astype(o_ref.dtype)
    o_ref[0, 3, :, :] = (0.25 * (d_ab - d_cd)).astype(o_ref.dtype)


def _weighted_mix_kernel(s2: int, w_ref, x_ref, o_ref):
    """General path: (s2 x s2) mix as VPU weighted sums, weights read from SMEM."""
    xs = [x_ref[0, j, :, :].astype(jnp.float32) for j in range(s2)]
    for i in range(s2):
        acc = w_ref[i, 0] * xs[0]
        for j in range(1, s2):
            acc = acc + w_ref[i, j] * xs[j]
        o_ref[0, i, :, :] = acc.astype(o_ref.dtype)


# ----------------------------------------------------------------------------
# Forward wrapper
# ----------------------------------------------------------------------------
def convds_forward(x: jnp.ndarray, scale: int, weights=None) -> jnp.ndarray:
    """Pallas implementation of ConvDS.forward(x, rev=False).  x: (B, C, H, W).

    If `weights` is None, the canonical setWeights() values are used (and the
    scale==2 case runs the baked-in butterfly kernel).  Passing explicit
    weights routes through the general SMEM weighted-sum kernel.
    """
    s = scale
    s2 = s * s
    B, C, H, W = x.shape

    # Replication padding; matches torch.nn.ReplicationPad2d(
    #   (wpad//2, wpad - wpad//2, hpad//2, hpad - hpad//2)) == (left,right,top,bottom)
    wpad = (s - W % s) % s
    hpad = (s - H % s) % s
    if wpad or hpad:
        x = jnp.pad(
            x,
            ((0, 0), (0, 0),
             (hpad // 2, hpad - hpad // 2),     # H axis: (top, bottom)
             (wpad // 2, wpad - wpad // 2)),    # W axis: (left, right)
            mode="edge",
        )
        H, W = x.shape[2], x.shape[3]
    Hs, Ws = H // s, W // s

    # Space-to-depth into (B, s2, C*Hs*Ws).  Phase index j = sh*s + sw matches
    # the PyTorch channel ordering.  The kernel output has the SAME layout,
    # which is already the final (B, s2*C, Hs, Ws) channel order, so no
    # post-kernel transpose is needed.
    # TODO(synk): the stride-s lane gather itself stays in XLA; a BlockSpec
    # cannot express the minor-dim stride efficiently.
    xb = x.reshape(B, C, Hs, s, Ws, s).transpose(0, 3, 5, 1, 2, 4)  # (B, s, s, C, Hs, Ws)
    N = C * Hs * Ws
    X = xb.reshape(B, s2, N)

    # Lane-dense packing: rows of 128 lanes, sublane tiles of 8 rows.
    itemsize = jnp.dtype(x.dtype).itemsize
    R = pl.cdiv(N, 128)
    R8 = _round_up(R, 8)
    # Tile budget: ~2 MiB of input per grid step (-> <=8 MiB total VMEM with
    # double-buffered in+out), independent of s2 / dtype.
    budget_bytes = 2 * 1024 * 1024
    max_tile = max(8, (budget_bytes // (s2 * 128 * itemsize)) // 8 * 8)
    if R8 <= max_tile:
        r_tile = R8
    else:
        r_tile = 8
        t = max_tile
        while t >= 8:                       # pick biggest tile with <=12.5% pad waste
            pad_rows = _round_up(R8, t) - R8
            if pad_rows * 8 <= R8:
                r_tile = t
                break
            t -= 8
    R_pad = _round_up(R8, r_tile)
    N_pad = R_pad * 128
    if N_pad != N:
        X = jnp.pad(X, ((0, 0), (0, 0), (0, N_pad - N)))
    X = X.reshape(B, s2, R_pad, 128)

    grid = (B, R_pad // r_tile)
    block = (1, s2, r_tile, 128)
    idx_map = lambda b, t: (b, 0, t, 0)

    common = dict(
        out_shape=jax.ShapeDtypeStruct((B, s2, R_pad, 128), x.dtype),
        compiler_params=pltpu.CompilerParams(
            dimension_semantics=("parallel", "parallel"),
            vmem_limit_bytes=32 * 1024 * 1024),
    )

    use_butterfly = (s == 2) and (weights is None)

    if use_butterfly:
        Y = pl.pallas_call(
            _butterfly_kernel,
            grid_spec=pltpu.PrefetchScalarGridSpec(
                num_scalar_prefetch=0,
                grid=grid,
                in_specs=[pl.BlockSpec(block, idx_map)],
                out_specs=pl.BlockSpec(block, idx_map),
            ),
            **common,
        )(X)
    else:
        if weights is None:
            weights = make_convds_weights(s)
        w = jnp.asarray(weights, dtype=jnp.float32)
        Y = pl.pallas_call(
            functools.partial(_weighted_mix_kernel, s2),
            grid_spec=pltpu.PrefetchScalarGridSpec(
                num_scalar_prefetch=0,
                grid=grid,
                in_specs=[
                    pl.BlockSpec(memory_space=pltpu.MemorySpace.SMEM),  # (s2, s2) weights
                    pl.BlockSpec(block, idx_map),
                ],
                out_specs=pl.BlockSpec(block, idx_map),
            ),
            **common,
        )(w, X)

    out = Y.reshape(B, s2, N_pad)
    if N_pad != N:
        out = out[:, :, :N]
    return out.reshape(B, s2 * C, Hs, Ws)


# ----------------------------------------------------------------------------
# Pure-JAX reference mirroring the PyTorch forward exactly
# ----------------------------------------------------------------------------
def convds_ref(x: jnp.ndarray, scale: int, weights=None) -> jnp.ndarray:
    s = scale
    s2 = s * s
    if weights is None:
        weights = make_convds_weights(s)
    weights = jnp.asarray(weights, dtype=jnp.float32)
    B, C, H, W = x.shape
    wpad = (s - W % s) % s
    hpad = (s - H % s) % s
    if wpad or hpad:
        x = jnp.pad(
            x,
            ((0, 0), (0, 0),
             (hpad // 2, hpad - hpad // 2),
             (wpad // 2, wpad - wpad // 2)),
            mode="edge",
        )
        H, W = x.shape[2], x.shape[3]
    Hs, Ws = H // s, W // s
    xb = x.reshape(B, C, Hs, s, Ws, s).transpose(0, 1, 3, 5, 2, 4)
    xb = xb.reshape(B, C, s2, Hs, Ws)
    out = jnp.einsum("ij,bcjhw->bcihw", weights, xb)   # grouped 1x1 conv
    out = out.transpose(0, 2, 1, 3, 4)                 # torch.transpose(out, 1, 2)
    return out.reshape(B, s2 * C, Hs, Ws)


if __name__ == "__main__":
    key = jax.random.PRNGKey(0)

    # 1) Primary case: scale=2, NCHW (2, 4, 16, 16), canonical weights
    #    -> baked butterfly kernel.
    scale = 2
    B, C, H, W = 2, 4, 16, 16
    x = jax.random.normal(key, (B, C, H, W), dtype=jnp.float32)
    y = jax.block_until_ready(convds_forward(x, scale))
    assert y.shape == (B, C * scale * scale, H // scale, W // scale), y.shape
    np.testing.assert_allclose(np.asarray(y), np.asarray(convds_ref(x, scale)),
                               rtol=1e-5, atol=1e-5)

    # 2) Odd spatial size (exercises replication padding + lane padding) with
    #    explicit runtime weights -> general SMEM weighted-sum kernel.
    x2 = jax.random.normal(jax.random.PRNGKey(1), (1, 3, 7, 10), dtype=jnp.float32)
    w2 = jnp.asarray(make_convds_weights(2))
    y2 = jax.block_until_ready(convds_forward(x2, 2, weights=w2))
    np.testing.assert_allclose(np.asarray(y2), np.asarray(convds_ref(x2, 2, w2)),
                               rtol=1e-5, atol=1e-5)

    # 3) scale=3 (identity-with-mean weights) through the general kernel.
    x3 = jax.random.normal(jax.random.PRNGKey(2), (1, 2, 9, 9), dtype=jnp.float32)
    y3 = jax.block_until_ready(convds_forward(x3, 3))
    np.testing.assert_allclose(np.asarray(y3), np.asarray(convds_ref(x3, 3)),
                               rtol=1e-5, atol=1e-5)

    print("KERNEL_OK")
</pallas_src>

<mosaic_0001>
module attributes {stable_mosaic.version = 11 : i64} {
  func.func @_butterfly_kernel(%arg0: i32, %arg1: i32, %arg2: memref<1x4x8x128xf32, #tpu.memory_space<vmem>>, %arg3: memref<1x4x8x128xf32, #tpu.memory_space<vmem>>) attributes {dimension_semantics = [#tpu.dimension_semantics<parallel>, #tpu.dimension_semantics<parallel>], iteration_bounds = array<i64: 2, 1>, scalar_prefetch = 0 : i64, scratch_operands = 0 : i64, tpu.core_type = #tpu.core_type<tc>, window_params = [{transform_indices = @transform_0, window_bounds = array<i64: 1, 4, 8, 128>}, {transform_indices = @transform_1, window_bounds = array<i64: 1, 4, 8, 128>}]} {
    %c0 = arith.constant 0 : index
    %c0_0 = arith.constant 0 : index
    %c0_1 = arith.constant 0 : index
    %c0_2 = arith.constant 0 : index
    %0 = vector.load %arg2[%c0, %c0_0, %c0_1, %c0_2] : memref<1x4x8x128xf32, #tpu.memory_space<vmem>>, vector<1x1x8x128xf32>
    %1 = vector.shape_cast %0 : vector<1x1x8x128xf32> to vector<8x128xf32>
    %c0_3 = arith.constant 0 : index
    %c1 = arith.constant 1 : index
    %c0_4 = arith.constant 0 : index
    %c0_5 = arith.constant 0 : index
    %2 = vector.load %arg2[%c0_3, %c1, %c0_4, %c0_5] : memref<1x4x8x128xf32, #tpu.memory_space<vmem>>, vector<1x1x8x128xf32>
    %3 = vector.shape_cast %2 : vector<1x1x8x128xf32> to vector<8x128xf32>
    %c0_6 = arith.constant 0 : index
    %c2 = arith.constant 2 : index
    %c0_7 = arith.constant 0 : index
    %c0_8 = arith.constant 0 : index
    %4 = vector.load %arg2[%c0_6, %c2, %c0_7, %c0_8] : memref<1x4x8x128xf32, #tpu.memory_space<vmem>>, vector<1x1x8x128xf32>
    %5 = vector.shape_cast %4 : vector<1x1x8x128xf32> to vector<8x128xf32>
    %c0_9 = arith.constant 0 : index
    %c3 = arith.constant 3 : index
    %c0_10 = arith.constant 0 : index
    %c0_11 = arith.constant 0 : index
    %6 = vector.load %arg2[%c0_9, %c3, %c0_10, %c0_11] : memref<1x4x8x128xf32, #tpu.memory_space<vmem>>, vector<1x1x8x128xf32>
    %7 = vector.shape_cast %6 : vector<1x1x8x128xf32> to vector<8x128xf32>
    %8 = arith.addf %1, %3 : vector<8x128xf32>
    %9 = arith.subf %1, %3 : vector<8x128xf32>
    %10 = arith.addf %5, %7 : vector<8x128xf32>
    %11 = arith.subf %5, %7 : vector<8x128xf32>
    %12 = arith.addf %8, %10 : vector<8x128xf32>
    %cst = arith.constant 2.500000e-01 : f32
    %13 = vector.broadcast %cst : f32 to vector<8x128xf32>
    %14 = arith.mulf %13, %12 : vector<8x128xf32>
    %c0_12 = arith.constant 0 : index
    %c0_13 = arith.constant 0 : index
    %c0_14 = arith.constant 0 : index
    %c0_15 = arith.constant 0 : index
    %15 = vector.load %arg3[%c0_12, %c0_13, %c0_14, %c0_15] : memref<1x4x8x128xf32, #tpu.memory_space<vmem>>, vector<1x1x8x128xf32>
    %16 = vector.shape_cast %15 : vector<1x1x8x128xf32> to vector<8x128xf32>
    %17 = vector.shape_cast %14 : vector<8x128xf32> to vector<1x1x8x128xf32>
    tpu.vector_store %arg3[%c0_12, %c0_13, %c0_14, %c0_15], %17 {strides = array<i32>} : memref<1x4x8x128xf32, #tpu.memory_space<vmem>>, vector<1x1x8x128xf32>,
    %18 = arith.addf %9, %11 : vector<8x128xf32>
    %cst_16 = arith.constant 2.500000e-01 : f32
    %19 = vector.broadcast %cst_16 : f32 to vector<8x128xf32>
    %20 = arith.mulf %19, %18 : vector<8x128xf32>
    %c0_17 = arith.constant 0 : index
    %c1_18 = arith.constant 1 : index
    %c0_19 = arith.constant 0 : index
    %c0_20 = arith.constant 0 : index
    %21 = vector.load %arg3[%c0_17, %c1_18, %c0_19, %c0_20] : memref<1x4x8x128xf32, #tpu.memory_space<vmem>>, vector<1x1x8x128xf32>
    %22 = vector.shape_cast %21 : vector<1x1x8x128xf32> to vector<8x128xf32>
    %23 = vector.shape_cast %20 : vector<8x128xf32> to vector<1x1x8x128xf32>
    tpu.vector_store %arg3[%c0_17, %c1_18, %c0_19, %c0_20], %23 {strides = array<i32>} : memref<1x4x8x128xf32, #tpu.memory_space<vmem>>, vector<1x1x8x128xf32>,
    %24 = arith.subf %8, %10 : vector<8x128xf32>
    %cst_21 = arith.constant 2.500000e-01 : f32
    %25 = vector.broadcast %cst_21 : f32 to vector<8x128xf32>
    %26 = arith.mulf %25, %24 : vector<8x128xf32>
    %c0_22 = arith.constant 0 : index
    %c2_23 = arith.constant 2 : index
    %c0_24 = arith.constant 0 : index
    %c0_25 = arith.constant 0 : index
    %27 = vector.load %arg3[%c0_22, %c2_23, %c0_24, %c0_25] : memref<1x4x8x128xf32, #tpu.memory_space<vmem>>, vector<1x1x8x128xf32>
    %28 = vector.shape_cast %27 : vector<1x1x8x128xf32> to vector<8x128xf32>
    %29 = vector.shape_cast %26 : vector<8x128xf32> to vector<1x1x8x128xf32>
    tpu.vector_store %arg3[%c0_22, %c2_23, %c0_24, %c0_25], %29 {strides = array<i32>} : memref<1x4x8x128xf32, #tpu.memory_space<vmem>>, vector<1x1x8x128xf32>,
    %30 = arith.subf %9, %11 : vector<8x128xf32>
    %cst_26 = arith.constant 2.500000e-01 : f32
    %31 = vector.broadcast %cst_26 : f32 to vector<8x128xf32>
    %32 = arith.mulf %31, %30 : vector<8x128xf32>
    %c0_27 = arith.constant 0 : index
    %c3_28 = arith.constant 3 : index
    %c0_29 = arith.constant 0 : index
    %c0_30 = arith.constant 0 : index
    %33 = vector.load %arg3[%c0_27, %c3_28, %c0_29, %c0_30] : memref<1x4x8x128xf32, #tpu.memory_space<vmem>>, vector<1x1x8x128xf32>
    %34 = vector.shape_cast %33 : vector<1x1x8x128xf32> to vector<8x128xf32>
    %35 = vector.shape_cast %32 : vector<8x128xf32> to vector<1x1x8x128xf32>
    tpu.vector_store %arg3[%c0_27, %c3_28, %c0_29, %c0_30], %35 {strides = array<i32>} : memref<1x4x8x128xf32, #tpu.memory_space<vmem>>, vector<1x1x8x128xf32>,
    return
  }
  func.func @transform_0(%arg0: i32, %arg1: i32) -> (i32, i32, i32, i32) {
    %c0_i32 = arith.constant 0 : i32
    %c0_i32_0 = arith.constant 0 : i32
    %c0_i32_1 = arith.constant 0 : i32
    return %arg0, %c0_i32, %arg1, %c0_i32_0 : i32, i32, i32, i32
  }
  func.func @transform_1(%arg0: i32, %arg1: i32) -> (i32, i32, i32, i32) {
    %c0_i32 = arith.constant 0 : i32
    %c0_i32_0 = arith.constant 0 : i32
    %c0_i32_1 = arith.constant 0 : i32
    return %arg0, %c0_i32, %arg1, %c0_i32_0 : i32, i32, i32, i32
  }
}

</mosaic_0001>

<llo_original>
// kernel: tpu_custom_call.1
$region0: #{tpu_custom_call.1}
  #allocation0 [shape = 'u32[]', space=smem, size = 0x4, offset = 0x4, fixed_abs, tag = 'smem constant byte address 0x4 - core index']
  #allocation1 [shape = 'u32[144,128]{1,0:T(1,128)}', space=vmem, size = 0x12000, scoped, tag = 'internal scratch']
  %s0 = inlined_call_operand.hbm [shape: f32[2,4,8,128], index: 0, kind: input, shape index: {}]
  %s1 = inlined_call_operand.hbm [shape: f32[2,4,8,128], index: 1, kind: output, shape index: {}]
  %s2 = sld [smem:[#allocation0]]
  $region41: #{tpu_custom_call.1} parent=0
    _
  %s4 = ssub.s32 1, %s2
  %s5 = scalar_select 0, %s4, %s2
  $region1: #{tpu_custom_call.1} parent=0
    #allocation2 [shape = 'u8[32768]{0}', space=vmem, size = 0x8000, scoped, tag = 'input window, operand 0']
    #allocation3 [shape = 's32[2]{0}', space=sflag, size = 0x8, scoped, tag = 'scoped memory for tpu_custom_call.1']
    #allocation4 [shape = 's32[2]{0}', space=sflag, size = 0x8, scoped, tag = 'scoped memory for tpu_custom_call.1']
    #allocation5 [shape = 'u8[32768]{0}', space=vmem, size = 0x8000, scoped, tag = 'output window, operand 0']
    %6 = vsyncpa [#allocation3], 0
    %s7 = scalar_lea.sflag [#allocation3], 1
    %8 = vsyncpa %s7, 0
    %9 = vsyncpa [#allocation4], 0
    %s10 = scalar_lea.sflag [#allocation4], 1
    %11 = vsyncpa %s10, 0
    loop: start=0, step=1, limit=4
    $region2: #{tpu_custom_call.1} parent=1 // loop_pre_header
      _
    $region3: #{tpu_custom_call.1} parent=1 // loop_header
      %s13 = sphi 0, %s17
      %p14 = scmp.ge.s32.totalorder %s13, 4
      %s20 = sphi 0, %s32
      %s21 = sphi 0, %s28
      %s22 = sphi 0, %s20
      %s23 = sphi 0, %s21
      %s24 = sphi 0, %s22
      %s25 = sphi 0, %s23
      %s37 = sphi 0, %s39
      %s40 = sphi 0, %s37
      %s41 = sphi 0, %s40
      %s57 = sphi 0, %s41
      %s65 = sphi 0, %s67
      %s68 = sphi 0, %s65
      %s69 = sphi 0, %s68
      %s85 = sphi 0, %s69
    $region4: #{tpu_custom_call.1} parent=1 // loop_header_branch
      %16 = sbr.rel (%p14) target = $region8
    $region5: #{tpu_custom_call.1} parent=1 // loop_body
      %s18 = ssub.s32 %s13, 1
      %s19 = ssub.s32 %s13, 2
      %s26 = sadd.s32 1, %s21
      %p27 = scmp.ge.s32.totalorder %s26, 1
      %s28 = scalar_select %p27, 0, %s26
      %s29 = sadd.s32 1, %s20
      %s30 = scalar_select %p27, %s29, %s20
      %p31 = scmp.ge.s32.totalorder %s30, 2
      %s32 = scalar_select %p31, 0, %s30
      %s33 = ssub.s32 %s20, %s32
      %s34 = ssub.s32 %s21, %s28
      %s35 = sor.u32 %s33, %s34
      %p36 = scmp.eq.s32.totalorder %s35, 0
      %s38 = sadd.s32 %s37, 1
      %s39 = scalar_select %p36, %s37, %s38
      %p42 = pneg %p36
      %p43 = scmp.eq.s32.totalorder %s13, 1
      %p44 = por %p42, %p43
      %p45 = scmp.ne.s32.totalorder %s37, %s40
      %p46 = scmp.eq.s32.totalorder %s13, 0
      %p47 = por %p45, %p46
      %p48 = scmp.ne.s32.totalorder %s37, %s40
      %p49 = scmp.eq.s32.totalorder %s18, 1
      %p50 = por %p48, %p49
      %p51 = scmp.ne.s32.totalorder %s40, %s41
      %p52 = scmp.eq.s32.totalorder %s18, 0
      %p53 = por %p51, %p52
      %p54 = scmp.ne.s32.totalorder %s40, %s41
      %p55 = scmp.eq.s32.totalorder %s19, 1
      %p56 = por %p54, %p55
      %p58 = scmp.ne.s32.totalorder %s41, %s57
      %p59 = scmp.eq.s32.totalorder %s19, 0
      %p60 = por %p58, %p59
      %s61 = ssub.s32 %s20, %s32
      %s62 = ssub.s32 %s21, %s28
      %s63 = sor.u32 %s61, %s62
      %p64 = scmp.eq.s32.totalorder %s63, 0
      %s66 = sadd.s32 %s65, 1
      %s67 = scalar_select %p64, %s65, %s66
      %p70 = pneg %p64
      %p71 = scmp.eq.s32.totalorder %s13, 1
      %p72 = por %p70, %p71
      %p73 = scmp.ne.s32.totalorder %s65, %s68
      %p74 = scmp.eq.s32.totalorder %s13, 0
      %p75 = por %p73, %p74
      %p76 = scmp.ne.s32.totalorder %s65, %s68
      %p77 = scmp.eq.s32.totalorder %s18, 1
      %p78 = por %p76, %p77
      %p79 = scmp.ne.s32.totalorder %s68, %s69
      %p80 = scmp.eq.s32.totalorder %s18, 0
      %p81 = por %p79, %p80
      %p82 = scmp.ne.s32.totalorder %s68, %s69
      %p83 = scmp.eq.s32.totalorder %s19, 1
      %p84 = por %p82, %p83
      %p86 = scmp.ne.s32.totalorder %s69, %s85
      %p87 = scmp.eq.s32.totalorder %s19, 0
      %p88 = por %p86, %p87
      %p89 = scmp.le.s32.totalorder 1, %s13
      %p90 = scmp.lt.s32.totalorder %s13, 3
      %p91 = pnand %p89, %p90
      %p92 = pneg %p91
      // Predicated region
      $region9: #{tpu_custom_call.1} parent=5 // pred_check
        _
      $region10: #{tpu_custom_call.1} parent=5 // pred_check_branch
        %94 = sbr.rel (%p91) target = $region12
      $region11: #{tpu_custom_call.1} parent=5 // pred_region
        %s95 = ssub.s32 %s13, 1
      $region12: #{tpu_custom_call.1} parent=5 // pred_fallthru
        _
      %p96 = scmp.lt.s32.totalorder %s13, 2
      // Predicated region
      $region13: #{tpu_custom_call.1} parent=5 // pred_check
        %p97 = pneg %p96
      $region14: #{tpu_custom_call.1} parent=5 // pred_check_branch
        %99 = sbr.rel (%p97) target = $region16
      $region15: #{tpu_custom_call.1} parent=5 // pred_region
        // Predicated region
        $region17: #{tpu_custom_call.1} parent=15 // pred_check
          %p100 = pneg %p47
        $region18: #{tpu_custom_call.1} parent=15 // pred_check_branch
          %102 = sbr.rel (%p100) target = $region20
        $region19: #{tpu_custom_call.1} parent=15 // pred_region
          %s103 = sand.u32 %s37, 1
          %s104 = scalar_lea.sflag [#allocation3], %s103
          %s105 = sand.u32 %s37, 1
          %s106 = smul.addr %s105, 32
          %s107 = scalar_lea.vmem [#allocation2], %s106
          %s109 = ssub.s32 512, 512
          %110 = vsyncadd %s104, %s109
          %s111 = smul.addr %s20, 4
          %s112 = sadd.s32 %s21, %s111
          %s113 = smul.addr %s112, 128
          %s114 = scalar_lea.hbm %s0, %s113
          %s115 = sshll.u32 %s107, 4
          %s116 = int_to_ptr.vmem [resolvable:$true] %s115
          %121 = dma.hbm_to_vmem [thread:$0]  %s114, 512, %s116, %s104, 128, 128, 8
        $region20: #{tpu_custom_call.1} parent=15 // pred_fallthru
          _
      $region16: #{tpu_custom_call.1} parent=5 // pred_fallthru
        _
      %p122 = scmp.le.s32.totalorder 1, %s13
      %p123 = scmp.lt.s32.totalorder %s13, 3
      %p124 = pnand %p122, %p123
      %p125 = pneg %p124
      // Predicated region
      $region21: #{tpu_custom_call.1} parent=5 // pred_check
        _
      $region22: #{tpu_custom_call.1} parent=5 // pred_check_branch
        %127 = sbr.rel (%p124) target = $region24
      $region23: #{tpu_custom_call.1} parent=5 // pred_region
        %s128 = ssub.s32 %s13, 1
        %s129 = sand.u32 %s40, 1
        %s130 = scalar_lea.sflag [#allocation3], %s129
        %s131 = sand.u32 %s40, 1
        %s132 = smul.addr %s131, 32
        %s133 = scalar_lea.vmem [#allocation2], %s132
        // Predicated region
        $region25: #{tpu_custom_call.1} parent=23 // pred_check
          %p134 = pneg %p53
        $region26: #{tpu_custom_call.1} parent=23 // pred_check_branch
          %136 = sbr.rel (%p134) target = $region28
        $region27: #{tpu_custom_call.1} parent=23 // pred_region
          %137 = dma.done %s130, 512
        $region28: #{tpu_custom_call.1} parent=23 // pred_fallthru
          _
        %s138 = sand.u32 %s40, 1
        %s139 = scalar_lea.sflag [#allocation3], %s138
        %s140 = sand.u32 %s40, 1
        %s141 = smul.addr %s140, 32
        %s142 = scalar_lea.vmem [#allocation2], %s141
        %p143 = pneg %p53
        %p144 = pneg %p50
        %p145 = pneg %p81
        %p146 = pneg %p78
        %s147 = sand.u32 %s68, 1
        %s148 = scalar_lea.sflag [#allocation4], %s147
        %s149 = sand.u32 %s68, 1
        %s150 = smul.addr %s149, 32
        %s151 = scalar_lea.vmem [#allocation5], %s150
        %v152 = vld [vmem:[%s133] sm:$0xff]
        %s153 = scalar_lea.vmem %s133, 8 [#allocation2]
        %v154 = vld [vmem:[%s153] sm:$0xff]
        %s155 = scalar_lea.vmem %s133, 16 [#allocation2]
        %v156 = vld [vmem:[%s155] sm:$0xff]
        %s157 = scalar_lea.vmem %s133, 24 [#allocation2]
        %v158 = vld [vmem:[%s157] sm:$0xff]
        %v159 = vadd.f32 %v152, %v154
        %v160 = vsub.f32 %v152, %v154
        %v161 = vadd.f32 %v156, %v158
        %v162 = vsub.f32 %v156, %v158
        %v163 = vadd.f32 %v159, %v161
        %v164 = vmul.f32 %v163, 0.25
        %165 = vst [vmem:[%s151] sm:$0xff] %v164
        %v166 = vadd.f32 %v160, %v162
        %v167 = vmul.f32 %v166, 0.25
        %s168 = scalar_lea.vmem %s151, 8 [#allocation5]
        %169 = vst [vmem:[%s168] sm:$0xff] %v167
        %v170 = vsub.f32 %v159, %v161
        %v171 = vmul.f32 %v170, 0.25
        %s172 = scalar_lea.vmem %s151, 16 [#allocation5]
        %173 = vst [vmem:[%s172] sm:$0xff] %v171
        %v174 = vsub.f32 %v160, %v162
        %v175 = vmul.f32 %v174, 0.25
        %s176 = scalar_lea.vmem %s151, 24 [#allocation5]
        %177 = vst [vmem:[%s176] sm:$0xff] %v175
        %s178 = sand.u32 %s68, 1
        %s179 = scalar_lea.sflag [#allocation4], %s178
        %s180 = sand.u32 %s68, 1
        %s181 = smul.addr %s180, 32
        %s182 = scalar_lea.vmem [#allocation5], %s181
        // Predicated region
        $region29: #{tpu_custom_call.1} parent=23 // pred_check
          %p183 = pneg %p78
        $region30: #{tpu_custom_call.1} parent=23 // pred_check_branch
          %185 = sbr.rel (%p183) target = $region32
        $region31: #{tpu_custom_call.1} parent=23 // pred_region
          %s187 = ssub.s32 512, 512
          %188 = vsyncadd %s179, %s187
          %s189 = smul.addr %s22, 4
          %s190 = sadd.s32 %s23, %s189
          %s191 = smul.addr %s190, 128
          %s192 = scalar_lea.hbm %s1, %s191
          %s193 = sshll.u32 %s182, 4
          %s194 = int_to_ptr.vmem [resolvable:$true] %s193
          %199 = dma.vmem_to_hbm [thread:$0]  %s194, 512, %s192, %s179, 128, 128, 8
        $region32: #{tpu_custom_call.1} parent=23 // pred_fallthru
          _
      $region24: #{tpu_custom_call.1} parent=5 // pred_fallthru
        _
      %p200 = scmp.le.s32.totalorder 2, %s13
      // Predicated region
      $region33: #{tpu_custom_call.1} parent=5 // pred_check
        %p201 = pneg %p200
      $region34: #{tpu_custom_call.1} parent=5 // pred_check_branch
        %203 = sbr.rel (%p201) target = $region36
      $region35: #{tpu_custom_call.1} parent=5 // pred_region
        %s204 = ssub.s32 %s13, 2
        // Predicated region
        $region37: #{tpu_custom_call.1} parent=35 // pred_check
          %p205 = pneg %p84
        $region38: #{tpu_custom_call.1} parent=35 // pred_check_branch
          %207 = sbr.rel (%p205) target = $region40
        $region39: #{tpu_custom_call.1} parent=35 // pred_region
          %s208 = sand.u32 %s69, 1
          %s209 = scalar_lea.sflag [#allocation4], %s208
          %s210 = sand.u32 %s69, 1
          %s211 = smul.addr %s210, 32
          %s212 = scalar_lea.vmem [#allocation5], %s211
          %213 = dma.done %s209, 512
        $region40: #{tpu_custom_call.1} parent=35 // pred_fallthru
          _
      $region36: #{tpu_custom_call.1} parent=5 // pred_fallthru
        _
    $region6: #{tpu_custom_call.1} parent=1 // loop_footer
      %s17 = sadd.s32 1, %s13
    $region7: #{tpu_custom_call.1} parent=1 // loop_footer_branch
      %12 = sbr.rel target = $region3
    $region8: #{tpu_custom_call.1} parent=1 // loop_exit
      _
    %214 = vsyncpa [#allocation3], 1
    %s215 = scalar_lea.sflag [#allocation3], 1
    %216 = vsyncpa %s215, 1
    %217 = vsyncpa [#allocation4], 1
    %s218 = scalar_lea.sflag [#allocation4], 1
    %219 = vsyncpa %s218, 1

</llo_original>
